<compile_context>
chip_gen: v6e
topology: v6e:2x2x1
jax: 0.10.0
libtpu: 0.0.40
codegen_flags: <defaults>
</compile_context>

<pallas_src>
import functools

import jax
import jax.numpy as jnp
import numpy as np
from jax.experimental import pallas as pl
from jax.experimental.pallas import tpu as pltpu


def _attention_kernel(x_ref, wxb_ref, bvec_ref, woutT_ref, out_ref, *,
                      n_classes: int):
    """One grid step == one tile of TB batch elements.

    x_ref:     (TB, S, D)  batch tile, (batch, seq, feature)
    wxb_ref:   (D, D)      Wxb.weight (torch (out, in) layout)
    bvec_ref:  (2, D)      row 0 = Wxb.bias, row 1 = Vt.weight
    woutT_ref: (D, Cp)     out.weight padded to Cp=round_up(C,128) and transposed
    out_ref:   (TB, Cp)    log-softmax rows for this batch tile
    """
    tb, s_len, d = x_ref.shape
    x3 = x_ref[...]                                            # (TB, S, D)
    x2 = x3.reshape(tb * s_len, d)                             # free: S % 8 == 0

    bvec = bvec_ref[...]
    b_row = bvec[0:1, :]                                       # (1, D)
    vt_row = bvec[1:2, :]                                      # (1, D)

    # H = tanh(X @ Wxb^T + b): ONE MXU matmul over all TB*S rows ("NT"
    # contraction over D keeps the torch weight layout, no transpose emitted).
    h = jnp.tanh(
        jax.lax.dot_general(
            x2, wxb_ref[...],
            dimension_numbers=(((1,), (1,)), ((), ())),
            preferred_element_type=jnp.float32)
        + b_row)                                               # (TB*S, D)

    # Vt projection as VPU multiply + lane reduce (no N=1 MXU matmul);
    # scores come out (TB, S) with the sequence axis on lanes.
    h3 = h.reshape(tb, s_len, d)
    scores = jnp.sum(h3 * vt_row, axis=-1)                     # (TB, S)

    # softmax over the sequence per batch row; exact divide (denominator is a
    # single scalar per row, approx reciprocal would only add numeric drift).
    m = jnp.max(scores, axis=-1, keepdims=True)
    e = jnp.exp(scores - m)
    a = e / jnp.sum(e, axis=-1, keepdims=True)                 # (TB, S)

    # attention-weighted sum over S (== torch.bmm), batched over TB on the
    # VPU/XLU instead of TB separate M=1 MXU matmuls.
    res = jnp.sum(a[:, :, None] * x3, axis=1)                  # (TB, D)

    # output projection: plain NN matmul against the pre-transposed padded
    # class matrix -> (TB, Cp) with Cp=128 lane-dense.
    logits = jnp.dot(res, woutT_ref[...],
                     preferred_element_type=jnp.float32)       # (TB, Cp)

    # log-softmax over the valid classes only; padded lanes masked to -inf so
    # they cannot contaminate max/sum and read as -inf (not finite junk).
    lane = jax.lax.broadcasted_iota(jnp.int32, logits.shape, 1)
    masked = jnp.where(lane < n_classes, logits, -jnp.inf)
    m2 = jnp.max(masked, axis=-1, keepdims=True)
    lse = jnp.log(jnp.sum(jnp.exp(masked - m2), axis=-1, keepdims=True)) + m2
    out_ref[...] = masked - lse                                # lane-dense store


def make_attention_params(wxb, bxb, vt_w, wout, lane_pad=128):
    """One-time parameter prep (hoisted out of the per-call hot path):
    bias + Vt are merged into one (2, D) row block, and out.weight is
    zero-padded along classes AND pre-transposed to (D, Cp) so the in-kernel
    logits projection is a plain NN matmul with a lane-dense output.
    """
    n_classes, d = wout.shape
    c_pad = lane_pad * (-(-n_classes // lane_pad))
    return dict(
        wxb=wxb,                                               # (D, D)
        bvec=jnp.stack([bxb, vt_w.reshape(d)], axis=0),        # (2, D)
        wout_pad_t=jnp.pad(
            wout, ((0, c_pad - n_classes), (0, 0))).T,         # (D, Cp)
        n_classes=n_classes,
    )


def attention_forward(x, params, *, batch_tile=None):
    """x: (S, B, D) float32 (seq, batch, feature) GRU output.
    Returns (B, C) log-probs."""
    s_len, batch, d = x.shape
    n_classes = params["n_classes"]
    c_pad = params["wout_pad_t"].shape[1]

    # The module's own x.transpose(0, 1): a single (S,B,D) -> (B,S,D) pass.
    # TODO(synk): at scale the GRU producer should emit (B, S, D) directly.
    x_bsd = jnp.transpose(x, (1, 0, 2))

    tb = batch if batch_tile is None else batch_tile
    assert batch % tb == 0, "batch must be divisible by batch_tile"
    grid = (batch // tb,)

    const = lambda i: (0, 0)   # weights: same block every step -> no re-DMA
    out_pad = pl.pallas_call(
        functools.partial(_attention_kernel, n_classes=n_classes),
        out_shape=jax.ShapeDtypeStruct((batch, c_pad), jnp.float32),
        grid=grid,
        in_specs=[
            pl.BlockSpec((tb, s_len, d), lambda i: (i, 0, 0)),  # x batch tile
            pl.BlockSpec((d, d), const),                        # Wxb.weight
            pl.BlockSpec((2, d), const),                        # [bias; Vt]
            pl.BlockSpec((d, c_pad), const),                    # out.weight^T
        ],
        out_specs=pl.BlockSpec((tb, c_pad), lambda i: (i, 0)),
        compiler_params=pltpu.CompilerParams(
            dimension_semantics=("parallel",)),  # v7x: batch tiles across TCs
    )(x_bsd, params["wxb"], params["bvec"], params["wout_pad_t"])
    return out_pad[:, :n_classes]


def attention_reference(x, wxb, bxb, vt_w, wout):
    """Pure-JAX reference mirroring the PyTorch Attention.forward."""
    h = jnp.tanh(jnp.einsum('sbd,ed->sbe', x, wxb) + bxb)      # (S,B,D)
    scores = jnp.einsum('sbd,od->sbo', h, vt_w)[..., 0]        # (S,B)
    a = jax.nn.softmax(scores.T, axis=-1)                      # (B,S)
    xt = jnp.transpose(x, (1, 0, 2))                           # (B,S,D)
    res = jnp.einsum('bs,bsd->bd', a, xt)                      # (B,D)
    logits = res @ wout.T                                      # (B,C)
    return jax.nn.log_softmax(logits, axis=-1)


if __name__ == "__main__":
    # Shapes implied by AtnCRNN defaults: hidden=16, nd=2 -> attention feature
    # dim D = 2*hidden = 32 (= linn), n_classes = 2; short sequence, batch 2.
    S, B, HIDDEN, C = 8, 2, 16, 2
    D = 2 * HIDDEN

    key = jax.random.PRNGKey(0)
    kx, k1, k2, k3, k4 = jax.random.split(key, 5)

    x = jax.random.normal(kx, (S, B, D), dtype=jnp.float32)        # GRU output

    # PyTorch nn.Linear layouts: weight is (out_features, in_features).
    wxb = jax.random.normal(k1, (D, D), dtype=jnp.float32) * 0.1   # Wxb.weight
    bxb = jax.random.normal(k2, (D,), dtype=jnp.float32) * 0.1     # Wxb.bias
    vt_w = jax.random.normal(k3, (1, D), dtype=jnp.float32) * 0.1  # Vt.weight
    wout = jax.random.normal(k4, (C, D), dtype=jnp.float32) * 0.1  # out.weight

    params = make_attention_params(wxb, bxb, vt_w, wout)
    out = jax.block_until_ready(attention_forward(x, params))

    ref = jax.block_until_ready(attention_reference(x, wxb, bxb, vt_w, wout))
    # Exact softmax division in-kernel -> tight tolerance (review item).
    np.testing.assert_allclose(np.asarray(out), np.asarray(ref),
                               rtol=1e-5, atol=1e-5)

    print("KERNEL_OK")
</pallas_src>

<mosaic_0001>
module attributes {stable_mosaic.version = 11 : i64} {
  func.func @_attention_kernel(%arg0: i32, %arg1: memref<2x8x32xf32, #tpu.memory_space<vmem>>, %arg2: memref<32x32xf32, #tpu.memory_space<vmem>>, %arg3: memref<2x32xf32, #tpu.memory_space<vmem>>, %arg4: memref<32x128xf32, #tpu.memory_space<vmem>>, %arg5: memref<2x128xf32, #tpu.memory_space<vmem>>) attributes {dimension_semantics = [#tpu.dimension_semantics<parallel>], iteration_bounds = array<i64: 1>, scalar_prefetch = 0 : i64, scratch_operands = 0 : i64, tpu.core_type = #tpu.core_type<tc>, window_params = [{transform_indices = @transform_0, window_bounds = array<i64: 2, 8, 32>}, {pipeline_mode = #tpu.pipeline_mode<synchronous>, transform_indices = @transform_1, window_bounds = array<i64: 32, 32>}, {pipeline_mode = #tpu.pipeline_mode<synchronous>, transform_indices = @transform_2, window_bounds = array<i64: 2, 32>}, {pipeline_mode = #tpu.pipeline_mode<synchronous>, transform_indices = @transform_3, window_bounds = array<i64: 32, 128>}, {transform_indices = @transform_4, window_bounds = array<i64: 2, 128>}]} {
    %c0 = arith.constant 0 : index
    %c0_0 = arith.constant 0 : index
    %c0_1 = arith.constant 0 : index
    %0 = vector.load %arg1[%c0, %c0_0, %c0_1] : memref<2x8x32xf32, #tpu.memory_space<vmem>>, vector<2x8x32xf32>
    %1 = vector.shape_cast %0 : vector<2x8x32xf32> to vector<16x32xf32>
    %c0_2 = arith.constant 0 : index
    %c0_3 = arith.constant 0 : index
    %2 = vector.load %arg3[%c0_2, %c0_3] : memref<2x32xf32, #tpu.memory_space<vmem>>, vector<2x32xf32>
    %3 = vector.extract_strided_slice %2 {offsets = [0, 0], sizes = [1, 32], strides = [1, 1]} : vector<2x32xf32> to vector<1x32xf32>
    %4 = vector.extract_strided_slice %2 {offsets = [1, 0], sizes = [1, 32], strides = [1, 1]} : vector<2x32xf32> to vector<1x32xf32>
    %c0_4 = arith.constant 0 : index
    %c0_5 = arith.constant 0 : index
    %5 = vector.load %arg2[%c0_4, %c0_5] : memref<32x32xf32, #tpu.memory_space<vmem>>, vector<32x32xf32>
    %cst = arith.constant dense<0.000000e+00> : vector<16x32xf32>
    %6 = tpu.matmul %1, %5, %cst {dimension_numbers = #tpu.dot_dimension_numbers<[1], [1], [0], [0], [0, 0, 1, 0], [], []>} : vector<16x32xf32>, vector<32x32xf32>, vector<16x32xf32> -> vector<16x32xf32>
    %7 = vector.broadcast %3 : vector<1x32xf32> to vector<16x32xf32>
    %8 = arith.addf %6, %7 : vector<16x32xf32>
    %9 = math.tanh %8 : vector<16x32xf32>
    %10 = vector.shape_cast %9 : vector<16x32xf32> to vector<2x8x32xf32>
    %11 = vector.shape_cast %4 : vector<1x32xf32> to vector<1x1x32xf32>
    %12 = vector.broadcast %11 : vector<1x1x32xf32> to vector<2x8x32xf32>
    %13 = arith.mulf %10, %12 : vector<2x8x32xf32>
    %cst_6 = arith.constant dense<0.000000e+00> : vector<2x8xf32>
    %14 = vector.multi_reduction <add>, %13, %cst_6 [2] : vector<2x8x32xf32> to vector<2x8xf32>
    %cst_7 = arith.constant dense<0xFF800000> : vector<2xf32>
    %15 = vector.multi_reduction <maximumf>, %14, %cst_7 [1] : vector<2x8xf32> to vector<2xf32>
    %16 = vector.shape_cast %15 : vector<2xf32> to vector<2x1xf32>
    %17 = vector.broadcast %16 : vector<2x1xf32> to vector<2x8xf32>
    %18 = arith.subf %14, %17 : vector<2x8xf32>
    %19 = math.exp %18 : vector<2x8xf32>
    %cst_8 = arith.constant dense<0.000000e+00> : vector<2xf32>
    %20 = vector.multi_reduction <add>, %19, %cst_8 [1] : vector<2x8xf32> to vector<2xf32>
    %21 = vector.shape_cast %20 : vector<2xf32> to vector<2x1xf32>
    %22 = vector.broadcast %21 : vector<2x1xf32> to vector<2x8xf32>
    %23 = arith.divf %19, %22 : vector<2x8xf32>
    %24 = vector.shape_cast %23 : vector<2x8xf32> to vector<2x8x1xf32>
    %25 = vector.broadcast %24 : vector<2x8x1xf32> to vector<2x8x32xf32>
    %26 = arith.mulf %25, %0 : vector<2x8x32xf32>
    %cst_9 = arith.constant dense<0.000000e+00> : vector<2x32xf32>
    %27 = vector.multi_reduction <add>, %26, %cst_9 [1] : vector<2x8x32xf32> to vector<2x32xf32>
    %c0_10 = arith.constant 0 : index
    %c0_11 = arith.constant 0 : index
    %28 = vector.load %arg4[%c0_10, %c0_11] : memref<32x128xf32, #tpu.memory_space<vmem>>, vector<32x128xf32>
    %cst_12 = arith.constant dense<0.000000e+00> : vector<2x128xf32>
    %29 = tpu.matmul %27, %28, %cst_12 {dimension_numbers = #tpu.dot_dimension_numbers<[1], [0], [0], [1], [0, 0, 1, 1], [], []>} : vector<2x32xf32>, vector<32x128xf32>, vector<2x128xf32> -> vector<2x128xf32>
    %30 = tpu.iota {dimensions = array<i32: 1>} : vector<2x128xi32>
    %c2_i32 = arith.constant 2 : i32
    %31 = vector.broadcast %c2_i32 : i32 to vector<2x128xi32>
    %32 = arith.cmpi slt, %30, %31 : vector<2x128xi32>
    %cst_13 = arith.constant 0xFF800000 : f32
    %33 = vector.broadcast %cst_13 : f32 to vector<2x128xf32>
    %34 = arith.select %32, %29, %33 : vector<2x128xi1>, vector<2x128xf32>
    %cst_14 = arith.constant dense<0xFF800000> : vector<2xf32>
    %35 = vector.multi_reduction <maximumf>, %34, %cst_14 [1] : vector<2x128xf32> to vector<2xf32>
    %36 = vector.shape_cast %35 : vector<2xf32> to vector<2x1xf32>
    %37 = vector.broadcast %36 : vector<2x1xf32> to vector<2x128xf32>
    %38 = arith.subf %34, %37 : vector<2x128xf32>
    %39 = math.exp %38 : vector<2x128xf32>
    %cst_15 = arith.constant dense<0.000000e+00> : vector<2xf32>
    %40 = vector.multi_reduction <add>, %39, %cst_15 [1] : vector<2x128xf32> to vector<2xf32>
    %41 = vector.shape_cast %40 : vector<2xf32> to vector<2x1xf32>
    %42 = math.log %41 : vector<2x1xf32>
    %43 = arith.addf %42, %36 : vector<2x1xf32>
    %44 = vector.broadcast %43 : vector<2x1xf32> to vector<2x128xf32>
    %45 = arith.subf %34, %44 : vector<2x128xf32>
    %c0_16 = arith.constant 0 : index
    %c0_17 = arith.constant 0 : index
    %46 = vector.load %arg5[%c0_16, %c0_17] : memref<2x128xf32, #tpu.memory_space<vmem>>, vector<2x128xf32>
    tpu.vector_store %arg5[%c0_16, %c0_17], %45 {strides = array<i32>} : memref<2x128xf32, #tpu.memory_space<vmem>>, vector<2x128xf32>,
    return
  }
  func.func @transform_0(%arg0: i32) -> (i32, i32, i32) {
    %c0_i32 = arith.constant 0 : i32
    %c0_i32_0 = arith.constant 0 : i32
    %c0_i32_1 = arith.constant 0 : i32
    return %arg0, %c0_i32, %c0_i32_0 : i32, i32, i32
  }
  func.func @transform_1(%arg0: i32) -> (i32, i32) {
    %c0_i32 = arith.constant 0 : i32
    %c0_i32_0 = arith.constant 0 : i32
    %c0_i32_1 = arith.constant 0 : i32
    return %c0_i32, %c0_i32_0 : i32, i32
  }
  func.func @transform_2(%arg0: i32) -> (i32, i32) {
    %c0_i32 = arith.constant 0 : i32
    %c0_i32_0 = arith.constant 0 : i32
    %c0_i32_1 = arith.constant 0 : i32
    return %c0_i32, %c0_i32_0 : i32, i32
  }
  func.func @transform_3(%arg0: i32) -> (i32, i32) {
    %c0_i32 = arith.constant 0 : i32
    %c0_i32_0 = arith.constant 0 : i32
    %c0_i32_1 = arith.constant 0 : i32
    return %c0_i32, %c0_i32_0 : i32, i32
  }
  func.func @transform_4(%arg0: i32) -> (i32, i32) {
    %c0_i32 = arith.constant 0 : i32
    %c0_i32_0 = arith.constant 0 : i32
    return %arg0, %c0_i32 : i32, i32
  }
}

</mosaic_0001>

<llo_original>
// kernel: tpu_custom_call.1
$region0: #{tpu_custom_call.1}
  #allocation0 [shape = 'u32[]', space=smem, size = 0x4, offset = 0x4, fixed_abs, tag = 'smem constant byte address 0x4 - core index']
  #allocation1 [shape = 'u32[144,128]{1,0:T(1,128)}', space=vmem, size = 0x12000, scoped, tag = 'internal scratch']
  %s0 = inlined_call_operand.hbm [shape: f32[2,8,32], index: 0, kind: input, shape index: {}]
  %s1 = inlined_call_operand.hbm [shape: f32[32,32], index: 1, kind: input, shape index: {}]
  %s2 = inlined_call_operand.vmem [shape: f32[2,32], index: 2, kind: input, shape index: {}]
  %s3 = inlined_call_operand.hbm [shape: f32[32,128], index: 3, kind: input, shape index: {}]
  %s4 = inlined_call_operand.hbm [shape: f32[2,128], index: 4, kind: output, shape index: {}]
  %s5 = sld [smem:[#allocation0]]
  $region38: #{tpu_custom_call.1} parent=0
    _
  %s7 = ssub.s32 1, %s5
  %s8 = scalar_select 0, %s7, %s5
  $region1: #{tpu_custom_call.1} parent=0
    #allocation2 [shape = 'u8[8192]{0}', space=vmem, size = 0x2000, scoped, tag = 'input window, operand 0, single buffered']
    #allocation3 [shape = 's32[1]{0}', space=sflag, size = 0x4, scoped, tag = 'scoped memory for tpu_custom_call.1']
    #allocation4 [shape = 's32[1]{0}', space=sflag, size = 0x4, scoped, tag = 'scoped memory for tpu_custom_call.1']
    #allocation5 [shape = 'u8[16384]{0}', space=vmem, size = 0x4000, scoped, tag = 'input window, operand 1, single buffered']
    #allocation6 [shape = 's32[1]{0}', space=sflag, size = 0x4, scoped, tag = 'scoped memory for tpu_custom_call.1']
    #allocation7 [shape = 'u8[16384]{0}', space=vmem, size = 0x4000, scoped, tag = 'input window, operand 3, single buffered']
    #allocation8 [shape = 'u8[1024]{0}', space=vmem, size = 0x400, scoped, tag = 'output window, operand 0, single buffered']
    %9 = vsyncpa [#allocation3], 0
    %10 = vsyncpa [#allocation6], 0
    %11 = vsyncpa [#allocation4], 0
    // Predicated region
    $region2: #{tpu_custom_call.1} parent=1 // pred_check
      _
    $region3: #{tpu_custom_call.1} parent=1 // pred_check_branch
      %13 = sbr.rel (0) target = $region5
    $region4: #{tpu_custom_call.1} parent=1 // pred_region
      %s15 = ssub.s32 256, 256
      %16 = vsyncadd [#allocation3], %s15
      %s17 = sshll.u32 [#allocation2], 4
      %s18 = int_to_ptr.vmem [resolvable:$true] %s17
      %23 = dma.hbm_to_vmem [thread:$0]  %s0, 256, %s18, [#allocation3], 128, 128, 8
    $region5: #{tpu_custom_call.1} parent=1 // pred_fallthru
      _
    // Predicated region
    $region6: #{tpu_custom_call.1} parent=1 // pred_check
      _
    $region7: #{tpu_custom_call.1} parent=1 // pred_check_branch
      %25 = sbr.rel (0) target = $region9
    $region8: #{tpu_custom_call.1} parent=1 // pred_region
      %s27 = ssub.s32 512, 512
      %28 = vsyncadd [#allocation6], %s27
      %s29 = sshll.u32 [#allocation5], 4
      %s30 = int_to_ptr.vmem [resolvable:$true] %s29
      %35 = dma.hbm_to_vmem [thread:$0]  %s1, 512, %s30, [#allocation6], 128, 128, 8
    $region9: #{tpu_custom_call.1} parent=1 // pred_fallthru
      _
    // Predicated region
    $region10: #{tpu_custom_call.1} parent=1 // pred_check
      _
    $region11: #{tpu_custom_call.1} parent=1 // pred_check_branch
      %37 = sbr.rel (0) target = $region13
    $region12: #{tpu_custom_call.1} parent=1 // pred_region
      _
    $region13: #{tpu_custom_call.1} parent=1 // pred_fallthru
      _
    // Predicated region
    $region14: #{tpu_custom_call.1} parent=1 // pred_check
      _
    $region15: #{tpu_custom_call.1} parent=1 // pred_check_branch
      %39 = sbr.rel (0) target = $region17
    $region16: #{tpu_custom_call.1} parent=1 // pred_region
      %s41 = ssub.s32 512, 512
      %42 = vsyncadd [#allocation6], %s41
      %s43 = sshll.u32 [#allocation7], 4
      %s44 = int_to_ptr.vmem [resolvable:$true] %s43
      %49 = dma.hbm_to_vmem [thread:$0]  %s3, 512, %s44, [#allocation6], 128, 128, 8
    $region17: #{tpu_custom_call.1} parent=1 // pred_fallthru
      _
    // Predicated region
    $region18: #{tpu_custom_call.1} parent=1 // pred_check
      _
    $region19: #{tpu_custom_call.1} parent=1 // pred_check_branch
      %51 = sbr.rel (0) target = $region21
    $region20: #{tpu_custom_call.1} parent=1 // pred_region
      %52 = dma.done [#allocation3], 256
    $region21: #{tpu_custom_call.1} parent=1 // pred_fallthru
      _
    // Predicated region
    $region22: #{tpu_custom_call.1} parent=1 // pred_check
      _
    $region23: #{tpu_custom_call.1} parent=1 // pred_check_branch
      %54 = sbr.rel (0) target = $region25
    $region24: #{tpu_custom_call.1} parent=1 // pred_region
      %55 = dma.done [#allocation6], 512
    $region25: #{tpu_custom_call.1} parent=1 // pred_fallthru
      _
    // Predicated region
    $region26: #{tpu_custom_call.1} parent=1 // pred_check
      _
    $region27: #{tpu_custom_call.1} parent=1 // pred_check_branch
      %57 = sbr.rel (0) target = $region29
    $region28: #{tpu_custom_call.1} parent=1 // pred_region
      %58 = dma.done [#allocation6], 512
    $region29: #{tpu_custom_call.1} parent=1 // pred_fallthru
      _
    %v59 = vld [vmem:[#allocation2] sm:$0xff]
    %v60 = vld [vmem:[#allocation2 + $0x8] sm:$0xff]
    %v61 = vld [vmem:[%s2] sm:$0x3]
    %v62 = vld [vmem:[#allocation5] sm:$0xff]
    %v63 = vld [vmem:[#allocation5 + $0x8] sm:$0xff]
    %v64 = vld [vmem:[#allocation5 + $0x10] sm:$0xff]
    %v65 = vld [vmem:[#allocation5 + $0x18] sm:$0xff]
    %v66 = vlaneseq
    %v67 = vshrl.u32 %v66, 7
    %v68 = vsub.s32 0, %v67
    %v69 = vrot.slane %v61, %v68
    %vm70 = vcmask 261120
    %v72 = vsel %vm70, %v59, 0
    %v75 = vsel %vm70, %v60, 0
    %v78 = vsel %vm70, %v62, 0
    %v81 = vsel %vm70, %v63, 0
    %v84 = vsel %vm70, %v64, 0
    %v87 = vsel %vm70, %v65, 0
    %89 = vmatprep.subr.mxu0 0.0
    %90 = vmatpush1.xpose.msra.mxu0 0.0
    %91 = vmatprep.subr.mxu0 0.0
    %92 = vmatpush1.xpose.msra.mxu0 0.0
    %93 = vmatprep.subr.mxu0 0.0
    %94 = vmatpush1.xpose.msra.mxu0 0.0
    %95 = vmatprep.subr.mxu0 0.0
    %96 = vmatpush1.xpose.msra.mxu0 0.0
    %97 = vmatprep.subr.mxu0 0.0
    %98 = vmatpush1.xpose.msra.mxu0 0.0
    %99 = vmatprep.subr.mxu0 0.0
    %100 = vmatpush1.xpose.msra.mxu0 0.0
    %101 = vmatprep.subr.mxu0 0.0
    %102 = vmatpush1.xpose.msra.mxu0 0.0
    %103 = vmatprep.subr.mxu0 0.0
    %104 = vmatpush1.xpose.msra.mxu0 0.0
    %105 = vmatprep.subr.mxu0 0.0
    %106 = vmatpush1.xpose.msra.mxu0 0.0
    %107 = vmatprep.subr.mxu0 0.0
    %108 = vmatpush1.xpose.msra.mxu0 0.0
    %109 = vmatprep.subr.mxu0 0.0
    %110 = vmatpush1.xpose.msra.mxu0 0.0
    %111 = vmatprep.subr.mxu0 0.0
    %112 = vmatpush1.xpose.msra.mxu0 0.0
    %113 = vmatprep.subr.mxu0 0.0
    %114 = vmatpush1.xpose.msra.mxu0 %v87
    %115 = vmatprep.subr.mxu0 0.0
    %116 = vmatpush1.xpose.msra.mxu0 %v84
    %117 = vmatprep.subr.mxu0 0.0
    %118 = vmatpush1.xpose.msra.mxu0 %v81
    %119 = vmatprep.subr.mxu0 0.0
    %120 = vmatpush1.xpose.msra.mxu0 %v78
    %121 = vmatprep.subr.mxu0 0.0
    %122 = vmatpush2.xpose.msra.mxu0 0.0
    %123 = vmatprep.subr.mxu0 0.0
    %124 = vmatpush2.xpose.msra.mxu0 0.0
    %125 = vmatprep.subr.mxu0 0.0
    %126 = vmatpush2.xpose.msra.mxu0 0.0
    %127 = vmatprep.subr.mxu0 0.0
    %128 = vmatpush2.xpose.msra.mxu0 0.0
    %129 = vmatprep.subr.mxu0 0.0
    %130 = vmatpush2.xpose.msra.mxu0 0.0
    %131 = vmatprep.subr.mxu0 0.0
    %132 = vmatpush2.xpose.msra.mxu0 0.0
    %133 = vmatprep.subr.mxu0 0.0
    %134 = vmatpush2.xpose.msra.mxu0 0.0
    %135 = vmatprep.subr.mxu0 0.0
    %136 = vmatpush2.xpose.msra.mxu0 0.0
    %137 = vmatprep.subr.mxu0 0.0
    %138 = vmatpush2.xpose.msra.mxu0 0.0
    %139 = vmatprep.subr.mxu0 0.0
    %140 = vmatpush2.xpose.msra.mxu0 0.0
    %141 = vmatprep.subr.mxu0 0.0
    %142 = vmatpush2.xpose.msra.mxu0 0.0
    %143 = vmatprep.subr.mxu0 0.0
    %144 = vmatpush2.xpose.msra.mxu0 0.0
    %145 = vmatprep.subr.mxu0 0.0
    %146 = vmatpush2.xpose.msra.mxu0 0.0
    %147 = vmatprep.subr.mxu0 0.0
    %148 = vmatpush2.xpose.msra.mxu0 0.0
    %149 = vmatprep.subr.mxu0 0.0
    %150 = vmatpush2.xpose.msra.mxu0 0.0
    %151 = vmatprep.subr.mxu0 0.0
    %152 = vmatpush2.xpose.msra.mxu0 0.0
    %153 = vmatprep.mubr.f32.mxu0 0.0
    %154 = vmatmul.mubr.f32.gmra.mxu0 %v72
    %v155 = vpop.f32.mrf.mxu0
    %v156 = vadd.f32 %v69, %v155
    %v157 = vpop.f32.mrf.mxu0
    %158 = vmatprep.mubr.f32.mxu0 0.0
    %159 = vmatmul.mubr.f32.gmra.mxu0 %v75
    %v160 = vpop.f32.mrf.mxu0
    %v161 = vadd.f32 %v69, %v160
    %v162 = vpop.f32.mrf.mxu0
    %163 = vdwg.mxu0
    %v164 = vtanh.pop %v156
    %v165 = vtanh.pop %v161
    %v166 = vlaneseq
    %v167 = vshrl.u32 %v166, 7
    %v168 = vsub.s32 1, %v167
    %v169 = vrot.slane %v61, %v168
    %v170 = vmul.f32 %v164, %v169
    %v171 = vmul.f32 %v165, %v169
    %v172 = vsel %vm70, %v170, 0.0
    %173 = vadd.xlane.f32.xlu0 %v172
    %v174 = vpop.xlane.xlu0 %173
    %v175 = vsel %vm70, %v171, 0.0
    %176 = vadd.xlane.f32.xlu0 %v175
    %v177 = vpop.xlane.xlu0 %176
    %v180 = vlaneseq
    %v181 = vand.u32 %v180, 127
    %v182 = vlaneseq
    %v183 = vshrl.u32 %v182, 7
    %v184 = vsub.s32 %v181, %v183
    %v185 = vrot.slane %v174, %v184
    %v186 = vlaneseq
    %v187 = vshrl.u32 %v186, 7
    %v188 = vsub.s32 %v181, %v187
    %v189 = vrot.slane %v177, %v188
    %vm190 = vcmask 1041409
    %v191 = vsel %vm190, %v189, %v185
    %vm193 = vcmask 58368
    %v194 = vsel %vm193, %v191, -inf
    %195 = vmax.xlane.f32.xlu0 %v194
    %v196 = vpop.xlane.xlu0 %195
    %v198 = vlaneseq
    %v199 = vshrl.u32 %v198, 7
    %v200 = vsub.s32 0, %v199
    %v201 = vrot.slane %v196, %v200
    %v202 = vlaneseq
    %v203 = vshrl.u32 %v202, 7
    %v204 = vsub.s32 1, %v203
    %v205 = vrot.slane %v196, %v204
    %v208 = vsub.f32 %v174, %v201
    %v209 = vsub.f32 %v177, %v205
    %v210 = vmul.f32 %v208, 1.442695
    %v211 = vpow.pop %v210
    %v212 = vmul.f32 %v209, 1.442695
    %v213 = vpow.pop %v212
    %216 = vset.pattern.permute.xlu0 0
    %217 = vperm.xlu0 %216, %v211
    %v218 = vpop.permute.xlu0 %217
    %219 = vset.pattern.permute.xlu0 0
    %220 = vperm.xlu0 %219, %v213
    %v221 = vpop.permute.xlu0 %220
    %v222 = vlaneseq
    %v223 = vshrl.u32 %v222, 7
    %v224 = vsub.s32 %v181, %v223
    %v225 = vrot.slane %v218, %v224
    %v226 = vlaneseq
    %v227 = vshrl.u32 %v226, 7
    %v228 = vsub.s32 %v181, %v227
    %v229 = vrot.slane %v221, %v228
    %v230 = vsel %vm190, %v229, %v225
    %v232 = vsel %vm193, %v230, 0.0
    %233 = vadd.xlane.f32.xlu0 %v232
    %v234 = vpop.xlane.xlu0 %233
    %v236 = vlaneseq
    %v237 = vshrl.u32 %v236, 7
    %v238 = vsub.s32 0, %v237
    %v239 = vrot.slane %v234, %v238
    %v240 = vlaneseq
    %v241 = vshrl.u32 %v240, 7
    %v242 = vsub.s32 1, %v241
    %v243 = vrot.slane %v234, %v242
    %v246 = vrcp.pop %v239
    %v247 = vmul.f32 %v211, %v246
    %v248 = vrcp.pop %v243
    %v249 = vmul.f32 %v213, %v248
    %251 = vset.pattern.permute.xlu0 0
    %252 = vperm.xlu0 %251, %v247
    %v253 = vpop.permute.xlu0 %252
    %256 = vset.pattern.permute.xlu0 0
    %257 = vperm.xlu0 %256, %v249
    %v258 = vpop.permute.xlu0 %257
    %v260 = vmul.f32 %v253, %v59
    %v261 = vmul.f32 %v258, %v60
    %v262 = vsel %vm70, %v260, 0.0
    %v263 = vrot.slane %v262, 4
    %v264 = vadd.f32 %v262, %v263
    %v265 = vrot.slane %v264, 2
    %v266 = vadd.f32 %v264, %v265
    %v267 = vrot.slane %v266, 1
    %v268 = vadd.f32 %v266, %v267
    %v269 = vsel %vm70, %v261, 0.0
    %v270 = vrot.slane %v269, 4
    %v271 = vadd.f32 %v269, %v270
    %v272 = vrot.slane %v271, 2
    %v273 = vadd.f32 %v271, %v272
    %v274 = vrot.slane %v273, 1
    %v275 = vadd.f32 %v273, %v274
    %v276 = vld [vmem:[#allocation7] sm:$0xff]
    %v277 = vld [vmem:[#allocation7 + $0x8] sm:$0xff]
    %v278 = vld [vmem:[#allocation7 + $0x10] sm:$0xff]
    %v279 = vld [vmem:[#allocation7 + $0x18] sm:$0xff]
    %v282 = vsel %vm190, %v275, %v268
    %v283 = vsel %vm70, %v282, 0
    %285 = vmatprep.subr.mxu0 0.0
    %286 = vmatpush1.msra.mxu0 0.0
    %287 = vmatprep.subr.mxu0 0.0
    %288 = vmatpush1.msra.mxu0 0.0
    %289 = vmatprep.subr.mxu0 0.0
    %290 = vmatpush1.msra.mxu0 0.0
    %291 = vmatprep.subr.mxu0 0.0
    %292 = vmatpush1.msra.mxu0 0.0
    %293 = vmatprep.subr.mxu0 0.0
    %294 = vmatpush1.msra.mxu0 0.0
    %295 = vmatprep.subr.mxu0 0.0
    %296 = vmatpush1.msra.mxu0 0.0
    %297 = vmatprep.subr.mxu0 0.0
    %298 = vmatpush1.msra.mxu0 0.0
    %299 = vmatprep.subr.mxu0 0.0
    %300 = vmatpush1.msra.mxu0 0.0
    %301 = vmatprep.subr.mxu0 0.0
    %302 = vmatpush1.msra.mxu0 0.0
    %303 = vmatprep.subr.mxu0 0.0
    %304 = vmatpush1.msra.mxu0 0.0
    %305 = vmatprep.subr.mxu0 0.0
    %306 = vmatpush1.msra.mxu0 0.0
    %307 = vmatprep.subr.mxu0 0.0
    %308 = vmatpush1.msra.mxu0 0.0
    %309 = vmatprep.subr.mxu0 0.0
    %310 = vmatpush1.msra.mxu0 %v279
    %311 = vmatprep.subr.mxu0 0.0
    %312 = vmatpush1.msra.mxu0 %v278
    %313 = vmatprep.subr.mxu0 0.0
    %314 = vmatpush1.msra.mxu0 %v277
    %315 = vmatprep.subr.mxu0 0.0
    %316 = vmatpush1.msra.mxu0 %v276
    %317 = vmatprep.subr.mxu0 0.0
    %318 = vmatpush2.msra.mxu0 0.0
    %319 = vmatprep.subr.mxu0 0.0
    %320 = vmatpush2.msra.mxu0 0.0
    %321 = vmatprep.subr.mxu0 0.0
    %322 = vmatpush2.msra.mxu0 0.0
    %323 = vmatprep.subr.mxu0 0.0
    %324 = vmatpush2.msra.mxu0 0.0
    %325 = vmatprep.subr.mxu0 0.0
    %326 = vmatpush2.msra.mxu0 0.0
    %327 = vmatprep.subr.mxu0 0.0
    %328 = vmatpush2.msra.mxu0 0.0
    %329 = vmatprep.subr.mxu0 0.0
    %330 = vmatpush2.msra.mxu0 0.0
    %331 = vmatprep.subr.mxu0 0.0
    %332 = vmatpush2.msra.mxu0 0.0
    %333 = vmatprep.subr.mxu0 0.0
    %334 = vmatpush2.msra.mxu0 0.0
    %335 = vmatprep.subr.mxu0 0.0
    %336 = vmatpush2.msra.mxu0 0.0
    %337 = vmatprep.subr.mxu0 0.0
    %338 = vmatpush2.msra.mxu0 0.0
    %339 = vmatprep.subr.mxu0 0.0
    %340 = vmatpush2.msra.mxu0 0.0
    %341 = vmatprep.subr.mxu0 0.0
    %342 = vmatpush2.msra.mxu0 0.0
    %343 = vmatprep.subr.mxu0 0.0
    %344 = vmatpush2.msra.mxu0 0.0
    %345 = vmatprep.subr.mxu0 0.0
    %346 = vmatpush2.msra.mxu0 0.0
    %347 = vmatprep.subr.mxu0 0.0
    %348 = vmatpush2.msra.mxu0 0.0
    %349 = vmatprep.mubr.f32.mxu0 0.0
    %350 = vmatmul.mubr.f32.gmra.mxu0 %v283
    %v351 = vpop.f32.mrf.mxu0
    %v352 = vadd.f32 0.0, %v351
    %v353 = vpop.f32.mrf.mxu0
    %354 = vdwg.mxu0
    %vm355 = vcmp.lt.s32.totalorder %v181, 2
    %v356 = vsel %vm355, %v352, -inf
    %vm357 = vcmask 1041408
    %v358 = vsel %vm357, %v356, -inf
    %359 = vmax.xlane.f32.xlu0 %v358
    %v360 = vpop.xlane.xlu0 %359
    %v361 = vsub.f32 %v356, %v360
    %v362 = vmul.f32 %v361, 1.442695
    %v363 = vpow.pop %v362
    %v364 = vsel %vm357, %v363, 0.0
    %365 = vadd.xlane.f32.xlu0 %v364
    %v366 = vpop.xlane.xlu0 %365
    %v367 = vlog2.pop %v366
    %v368 = vmul.f32 %v367, 0.6931472
    %v369 = vadd.f32 %v368, %v360
    %v370 = vsub.f32 %v356, %v369
    %371 = vst [vmem:[#allocation8] sm:$0x3] %v370
    // Predicated region
    $region30: #{tpu_custom_call.1} parent=1 // pred_check
      _
    $region31: #{tpu_custom_call.1} parent=1 // pred_check_branch
      %373 = sbr.rel (0) target = $region33
    $region32: #{tpu_custom_call.1} parent=1 // pred_region
      %s375 = ssub.s32 32, 32
      %376 = vsyncadd [#allocation4], %s375
      %s378 = sshll.u32 [#allocation8], 4
      %s379 = int_to_ptr.vmem [resolvable:$true] %s378
      %381 = dma.vmem_to_hbm [thread:$0]  %s379, 32, %s4, [#allocation4]
    $region33: #{tpu_custom_call.1} parent=1 // pred_fallthru
      _
    // Predicated region
    $region34: #{tpu_custom_call.1} parent=1 // pred_check
      _
    $region35: #{tpu_custom_call.1} parent=1 // pred_check_branch
      %383 = sbr.rel (0) target = $region37
    $region36: #{tpu_custom_call.1} parent=1 // pred_region
      %384 = dma.done [#allocation4], 32
    $region37: #{tpu_custom_call.1} parent=1 // pred_fallthru
      _
    %385 = vsyncpa [#allocation3], 1
    %386 = vsyncpa [#allocation6], 1
    %387 = vsyncpa [#allocation4], 1

</llo_original>
